<compile_context>
chip_gen: v7x
topology: tpu7x:2x2x1
jax: 0.10.0
libtpu: 0.0.40
codegen_flags: <defaults>
</compile_context>

<pallas_src>
import numpy as np
import jax
import jax.numpy as jnp
from jax.experimental import pallas as pl
from jax.experimental.pallas import tpu as pltpu


def _round_up(x, m):
    return ((x + m - 1) // m) * m


# ---------------------------------------------------------------------------
# Prologue kernel (one-shot): experts MLP on GLOBAL rows 0..2 + the 3 towers
# + final MLP + sigmoid on the 4 candidate rows  ->  probability LUT (4, 1).
#   LUT[0] = P(slot not in {1,2,3}),  LUT[t] = P(slot == t) for t in {1,2,3}.
# ---------------------------------------------------------------------------
def lut_kernel(x_ref, ew1, eb1, ew2, eb2, tw1, tb1, tw2, tb2,
               m1, mb1, m2, mb2, m3, mb3, lut_ref):
    x = x_ref[...]                                                      # (3, 152)
    h = jnp.maximum(jnp.dot(x, ew1[...], preferred_element_type=jnp.float32) + eb1[...], 0.0)
    eo = jnp.maximum(jnp.dot(h, ew2[...], preferred_element_type=jnp.float32) + eb2[...], 0.0)  # (3, 32)

    # rows of the slot-select table: row 0 = zeros, row t+1 = tower_t(eo[t])
    row_ids = jax.lax.broadcasted_iota(jnp.int32, (4, 1), 0)
    rows = jnp.zeros((4, 16), jnp.float32)
    for t in range(3):                               # static unroll: 3 tiny chains
        ti = eo[t:t + 1, :]                                             # (1, 32)
        th = jnp.maximum(jnp.dot(ti, tw1[t], preferred_element_type=jnp.float32) + tb1[t], 0.0)
        to = jnp.dot(th, tw2[t], preferred_element_type=jnp.float32) + tb2[t]    # (1, 16)
        rows = jnp.where(row_ids == (t + 1), to, rows)                  # place row t+1

    # final MLP(16, True, [32, 16]) + sigmoid on the 4 candidate rows
    z = jnp.maximum(jnp.dot(rows, m1[...], preferred_element_type=jnp.float32) + mb1[...], 0.0)  # (4, 32)
    z = jnp.maximum(jnp.dot(z, m2[...], preferred_element_type=jnp.float32) + mb2[...], 0.0)     # (4, 16)
    z = jnp.dot(z, m3[...], preferred_element_type=jnp.float32) + mb3[...]                       # (4, 1)
    # sigmoid via EUP tanh (numerically stable, no inf intermediate)
    lut_ref[...] = 0.5 * (jnp.tanh(0.5 * z) + 1.0)


# ---------------------------------------------------------------------------
# Hot-path kernel: per batch tile, a 4-way select on the slot id against the
# SMEM-resident LUT.  Pure ~8 B/sample HBM traffic, lane-dense (1, TB) store.
# ---------------------------------------------------------------------------
def ctr_kernel(lut_ref, slot_ref, out_ref):
    slot = slot_ref[...]                                                # (1, TB) int32
    out_ref[...] = jnp.where(
        slot == 1, lut_ref[1, 0],
        jnp.where(slot == 2, lut_ref[2, 0],
                  jnp.where(slot == 3, lut_ref[3, 0], lut_ref[0, 0])))


# ---------------------------------------------------------------------------
# Wrapper
# ---------------------------------------------------------------------------
def shared_bottom_forward(params, sparse, *, tile_b=None):
    """sparse: (b, 19) int32 raw categorical ids (col 18 = slot id). Returns (b, 1) f32."""
    b = sparse.shape[0]
    assert b >= 3, "zip-over-rows tower semantics requires batch >= 3 (as in the PyTorch model)"
    slot_id = sparse[:, 18].astype(jnp.int32)

    # --- one-shot prologue: probability LUT from GLOBAL rows 0..2 -------------
    # TODO(synk): embedding-row gather stays in plain JAX (no clean rectangular-
    # tile Pallas equivalent for this per-element gather); only rows 0..2 are live.
    idx3 = sparse[:3] + params["offsets"][None, :]
    x3 = params["emb"][idx3].reshape(3, -1).astype(jnp.float32)         # (3, 152)

    vmem = pl.BlockSpec(memory_space=pltpu.MemorySpace.VMEM)
    lut = pl.pallas_call(
        lut_kernel,
        out_shape=jax.ShapeDtypeStruct((4, 1), jnp.float32),
        in_specs=[vmem] * 15,
        out_specs=vmem,
    )(x3, params["ew1"], params["eb1"], params["ew2"], params["eb2"],
      params["tw1"], params["tb1"], params["tw2"], params["tb2"],
      params["m1"], params["mb1"], params["m2"], params["mb2"],
      params["m3"], params["mb3"])

    # --- tiled hot path: slot -> LUT select, batch on lanes -------------------
    # Big tiles to amortize the ~0.35 us per-grid-step overhead, but keep >= 2
    # grid steps so v7x's two TensorCores can both be used.
    if tile_b is None:
        tile_b = max(128, min(32768, _round_up(pl.cdiv(b, 2), 128)))
    b_pad = _round_up(b, tile_b)
    n_tiles = b_pad // tile_b
    slot_row = jnp.pad(slot_id, (0, b_pad - b)).reshape(1, b_pad)       # pad slot -> 0 (LUT[0])

    out = pl.pallas_call(
        ctr_kernel,
        out_shape=jax.ShapeDtypeStruct((1, b_pad), jnp.float32),
        grid=(n_tiles,),
        in_specs=[
            pl.BlockSpec(memory_space=pltpu.MemorySpace.SMEM),          # (4, 1) LUT scalars
            pl.BlockSpec((1, tile_b), lambda i: (0, i)),                # slot ids (batch-tiled)
        ],
        out_specs=pl.BlockSpec((1, tile_b), lambda i: (0, i)),          # lane-dense output
        compiler_params=pltpu.CompilerParams(
            dimension_semantics=("parallel",),                          # v7x: shard grid across 2 TCs
        ),
        cost_estimate=pl.CostEstimate(flops=3 * b_pad, transcendentals=0,
                                      bytes_accessed=8 * b_pad + 16),
    )(lut, slot_row)

    return out[0, :b][:, None]                                          # (b, 1)


# ---------------------------------------------------------------------------
# Pure-JAX reference (faithful to the PyTorch forward, incl. dead experts work)
# ---------------------------------------------------------------------------
def reference_forward(params, sparse):
    b = sparse.shape[0]
    slot = sparse[:, 18][:, None]
    idx = sparse + params["offsets"][None, :]
    x = params["emb"][idx].reshape(b, -1).astype(jnp.float32)
    h = jnp.maximum(x @ params["ew1"] + params["eb1"], 0.0)
    eo = jnp.maximum(h @ params["ew2"] + params["eb2"], 0.0)
    out = jnp.zeros((b, 16), jnp.float32)
    for t in range(3):
        ti = eo[t:t + 1, :]
        th = jnp.maximum(ti @ params["tw1"][t] + params["tb1"][t], 0.0)
        to = th @ params["tw2"][t] + params["tb2"][t]
        out = jnp.where(slot == (t + 1), to, out)
    z = jnp.maximum(out @ params["m1"] + params["mb1"], 0.0)
    z = jnp.maximum(z @ params["m2"] + params["mb2"], 0.0)
    z = z @ params["m3"] + params["mb3"]
    return jax.nn.sigmoid(z)


# ---------------------------------------------------------------------------
# Parameter init (matches PyTorch defaults; weights stored (in, out))
# ---------------------------------------------------------------------------
def init_params(key, feature_dims, embed_dim=8):
    n_cols = len(feature_dims)
    input_size = n_cols * embed_dim
    experts_hidden = experts_out = towers_hidden = 32

    keys = iter(jax.random.split(key, 64))

    def linear(fan_in, fan_out):
        lim = 1.0 / np.sqrt(fan_in)                     # nn.Linear default init
        w = jax.random.uniform(next(keys), (fan_in, fan_out), jnp.float32, -lim, lim)
        b = jax.random.uniform(next(keys), (1, fan_out), jnp.float32, -lim, lim)
        return w, b

    num_emb = int(np.sum(feature_dims))
    xav = np.sqrt(6.0 / (num_emb + embed_dim))          # xavier_uniform_
    emb = jax.random.uniform(next(keys), (num_emb, embed_dim), jnp.float32, -xav, xav)
    offsets = jnp.asarray(np.array((0, *np.cumsum(feature_dims)[:-1])), jnp.int32)

    ew1, eb1 = linear(input_size, experts_hidden)
    ew2, eb2 = linear(experts_hidden, experts_out)

    tw1s, tb1s, tw2s, tb2s = [], [], [], []
    for _ in range(3):
        w1, b1 = linear(experts_out, towers_hidden)
        w2, b2 = linear(towers_hidden, 16)
        tw1s.append(w1); tb1s.append(b1); tw2s.append(w2); tb2s.append(b2)

    m1, mb1 = linear(16, 32)
    m2, mb2 = linear(32, 16)
    m3, mb3 = linear(16, 1)

    return dict(
        emb=emb, offsets=offsets,
        ew1=ew1, eb1=eb1, ew2=ew2, eb2=eb2,
        tw1=jnp.stack(tw1s), tb1=jnp.stack(tb1s),       # (3,32,32), (3,1,32)
        tw2=jnp.stack(tw2s), tb2=jnp.stack(tb2s),       # (3,32,16), (3,1,16)
        m1=m1, mb1=mb1, m2=m2, mb2=mb2, m3=m3, mb3=mb3,
    )


if __name__ == "__main__":
    key = jax.random.PRNGKey(0)
    k_param, k_sparse, k_slot = jax.random.split(key, 3)

    # 19 sparse columns (column 18 is the slot id), each vocabulary size 10.
    feature_dims = [10] * 19
    embed_dim = 8
    batch = 300          # >= 3 (zip-over-rows semantics); not a tile multiple on purpose

    params = init_params(k_param, feature_dims, embed_dim)

    sparse = jax.random.randint(k_sparse, (batch, 19), 0, 10, dtype=jnp.int32)
    slot_col = jax.random.randint(k_slot, (batch,), 0, 4, dtype=jnp.int32)   # {0,1,2,3}
    sparse = sparse.at[:, 18].set(slot_col)

    ctr = shared_bottom_forward(params, sparse)          # auto tile: 2 grid steps, padded lanes
    ctr = jax.block_until_ready(ctr)

    ref = jax.block_until_ready(reference_forward(params, sparse))
    assert ctr.shape == (batch, 1)
    np.testing.assert_allclose(np.asarray(ctr), np.asarray(ref), rtol=1e-5, atol=1e-5)

    print("KERNEL_OK")
</pallas_src>

<mosaic_0001>
module attributes {stable_mosaic.version = 11 : i64} {
  func.func @lut_kernel(%arg0: memref<3x152xf32, #tpu.memory_space<vmem>>, %arg1: memref<152x32xf32, #tpu.memory_space<vmem>>, %arg2: memref<1x32xf32, #tpu.memory_space<vmem>>, %arg3: memref<32x32xf32, #tpu.memory_space<vmem>>, %arg4: memref<1x32xf32, #tpu.memory_space<vmem>>, %arg5: memref<3x32x32xf32, #tpu.memory_space<vmem>>, %arg6: memref<3x1x32xf32, #tpu.memory_space<vmem>>, %arg7: memref<3x32x16xf32, #tpu.memory_space<vmem>>, %arg8: memref<3x1x16xf32, #tpu.memory_space<vmem>>, %arg9: memref<16x32xf32, #tpu.memory_space<vmem>>, %arg10: memref<1x32xf32, #tpu.memory_space<vmem>>, %arg11: memref<32x16xf32, #tpu.memory_space<vmem>>, %arg12: memref<1x16xf32, #tpu.memory_space<vmem>>, %arg13: memref<16x1xf32, #tpu.memory_space<vmem>>, %arg14: memref<1x1xf32, #tpu.memory_space<vmem>>, %arg15: memref<4x1xf32, #tpu.memory_space<vmem>>) attributes {dimension_semantics = [], scalar_prefetch = 0 : i64, scratch_operands = 0 : i64, tpu.core_type = #tpu.core_type<tc>} {
    %c0 = arith.constant 0 : index
    %c0_0 = arith.constant 0 : index
    %0 = vector.load %arg0[%c0, %c0_0] : memref<3x152xf32, #tpu.memory_space<vmem>>, vector<3x152xf32>
    %c0_1 = arith.constant 0 : index
    %c0_2 = arith.constant 0 : index
    %1 = vector.load %arg1[%c0_1, %c0_2] : memref<152x32xf32, #tpu.memory_space<vmem>>, vector<152x32xf32>
    %cst = arith.constant dense<0.000000e+00> : vector<3x32xf32>
    %2 = tpu.matmul %0, %1, %cst {dimension_numbers = #tpu.dot_dimension_numbers<[1], [0], [0], [1], [0, 0, 1, 1], [], []>} : vector<3x152xf32>, vector<152x32xf32>, vector<3x32xf32> -> vector<3x32xf32>
    %c0_3 = arith.constant 0 : index
    %c0_4 = arith.constant 0 : index
    %3 = vector.load %arg2[%c0_3, %c0_4] : memref<1x32xf32, #tpu.memory_space<vmem>>, vector<1x32xf32>
    %4 = vector.broadcast %3 : vector<1x32xf32> to vector<3x32xf32>
    %5 = arith.addf %2, %4 : vector<3x32xf32>
    %cst_5 = arith.constant 0.000000e+00 : f32
    %6 = vector.broadcast %cst_5 : f32 to vector<3x32xf32>
    %7 = arith.maximumf %5, %6 : vector<3x32xf32>
    %c0_6 = arith.constant 0 : index
    %c0_7 = arith.constant 0 : index
    %8 = vector.load %arg3[%c0_6, %c0_7] : memref<32x32xf32, #tpu.memory_space<vmem>>, vector<32x32xf32>
    %cst_8 = arith.constant dense<0.000000e+00> : vector<3x32xf32>
    %9 = tpu.matmul %7, %8, %cst_8 {dimension_numbers = #tpu.dot_dimension_numbers<[1], [0], [0], [1], [0, 0, 1, 1], [], []>} : vector<3x32xf32>, vector<32x32xf32>, vector<3x32xf32> -> vector<3x32xf32>
    %c0_9 = arith.constant 0 : index
    %c0_10 = arith.constant 0 : index
    %10 = vector.load %arg4[%c0_9, %c0_10] : memref<1x32xf32, #tpu.memory_space<vmem>>, vector<1x32xf32>
    %11 = vector.broadcast %10 : vector<1x32xf32> to vector<3x32xf32>
    %12 = arith.addf %9, %11 : vector<3x32xf32>
    %cst_11 = arith.constant 0.000000e+00 : f32
    %13 = vector.broadcast %cst_11 : f32 to vector<3x32xf32>
    %14 = arith.maximumf %12, %13 : vector<3x32xf32>
    %15 = tpu.iota {dimensions = array<i32: 0>} : vector<4x1xi32>
    %cst_12 = arith.constant 0.000000e+00 : f32
    %16 = vector.broadcast %cst_12 : f32 to vector<4x16xf32>
    %17 = vector.extract_strided_slice %14 {offsets = [0, 0], sizes = [1, 32], strides = [1, 1]} : vector<3x32xf32> to vector<1x32xf32>
    %c0_13 = arith.constant 0 : index
    %c0_14 = arith.constant 0 : index
    %c0_15 = arith.constant 0 : index
    %18 = vector.load %arg5[%c0_13, %c0_14, %c0_15] : memref<3x32x32xf32, #tpu.memory_space<vmem>>, vector<1x32x32xf32>
    %19 = vector.shape_cast %18 : vector<1x32x32xf32> to vector<32x32xf32>
    %cst_16 = arith.constant dense<0.000000e+00> : vector<1x32xf32>
    %20 = tpu.matmul %17, %19, %cst_16 {dimension_numbers = #tpu.dot_dimension_numbers<[1], [0], [0], [1], [0, 0, 1, 1], [], []>} : vector<1x32xf32>, vector<32x32xf32>, vector<1x32xf32> -> vector<1x32xf32>
    %c0_17 = arith.constant 0 : index
    %c0_18 = arith.constant 0 : index
    %c0_19 = arith.constant 0 : index
    %21 = vector.load %arg6[%c0_17, %c0_18, %c0_19] : memref<3x1x32xf32, #tpu.memory_space<vmem>>, vector<1x1x32xf32>
    %22 = vector.shape_cast %21 : vector<1x1x32xf32> to vector<1x32xf32>
    %23 = arith.addf %20, %22 : vector<1x32xf32>
    %cst_20 = arith.constant 0.000000e+00 : f32
    %24 = vector.broadcast %cst_20 : f32 to vector<1x32xf32>
    %25 = arith.maximumf %23, %24 : vector<1x32xf32>
    %c0_21 = arith.constant 0 : index
    %c0_22 = arith.constant 0 : index
    %c0_23 = arith.constant 0 : index
    %26 = vector.load %arg7[%c0_21, %c0_22, %c0_23] : memref<3x32x16xf32, #tpu.memory_space<vmem>>, vector<1x32x16xf32>
    %27 = vector.shape_cast %26 : vector<1x32x16xf32> to vector<32x16xf32>
    %cst_24 = arith.constant dense<0.000000e+00> : vector<1x16xf32>
    %28 = tpu.matmul %25, %27, %cst_24 {dimension_numbers = #tpu.dot_dimension_numbers<[1], [0], [0], [1], [0, 0, 1, 1], [], []>} : vector<1x32xf32>, vector<32x16xf32>, vector<1x16xf32> -> vector<1x16xf32>
    %c0_25 = arith.constant 0 : index
    %c0_26 = arith.constant 0 : index
    %c0_27 = arith.constant 0 : index
    %29 = vector.load %arg8[%c0_25, %c0_26, %c0_27] : memref<3x1x16xf32, #tpu.memory_space<vmem>>, vector<1x1x16xf32>
    %30 = vector.shape_cast %29 : vector<1x1x16xf32> to vector<1x16xf32>
    %31 = arith.addf %28, %30 : vector<1x16xf32>
    %c1_i32 = arith.constant 1 : i32
    %32 = vector.broadcast %c1_i32 : i32 to vector<4x1xi32>
    %33 = arith.cmpi eq, %15, %32 : vector<4x1xi32>
    %34 = vector.shape_cast %33 : vector<4x1xi1> to vector<4x1xi1>
    %35 = vector.broadcast %34 : vector<4x1xi1> to vector<4x16xi1>
    %36 = vector.shape_cast %31 : vector<1x16xf32> to vector<1x16xf32>
    %37 = vector.broadcast %36 : vector<1x16xf32> to vector<4x16xf32>
    %38 = arith.select %35, %37, %16 : vector<4x16xi1>, vector<4x16xf32>
    %39 = vector.extract_strided_slice %14 {offsets = [1, 0], sizes = [1, 32], strides = [1, 1]} : vector<3x32xf32> to vector<1x32xf32>
    %c1 = arith.constant 1 : index
    %c0_28 = arith.constant 0 : index
    %c0_29 = arith.constant 0 : index
    %40 = vector.load %arg5[%c1, %c0_28, %c0_29] : memref<3x32x32xf32, #tpu.memory_space<vmem>>, vector<1x32x32xf32>
    %41 = vector.shape_cast %40 : vector<1x32x32xf32> to vector<32x32xf32>
    %cst_30 = arith.constant dense<0.000000e+00> : vector<1x32xf32>
    %42 = tpu.matmul %39, %41, %cst_30 {dimension_numbers = #tpu.dot_dimension_numbers<[1], [0], [0], [1], [0, 0, 1, 1], [], []>} : vector<1x32xf32>, vector<32x32xf32>, vector<1x32xf32> -> vector<1x32xf32>
    %c1_31 = arith.constant 1 : index
    %c0_32 = arith.constant 0 : index
    %c0_33 = arith.constant 0 : index
    %43 = vector.load %arg6[%c1_31, %c0_32, %c0_33] : memref<3x1x32xf32, #tpu.memory_space<vmem>>, vector<1x1x32xf32>
    %44 = vector.shape_cast %43 : vector<1x1x32xf32> to vector<1x32xf32>
    %45 = arith.addf %42, %44 : vector<1x32xf32>
    %cst_34 = arith.constant 0.000000e+00 : f32
    %46 = vector.broadcast %cst_34 : f32 to vector<1x32xf32>
    %47 = arith.maximumf %45, %46 : vector<1x32xf32>
    %c1_35 = arith.constant 1 : index
    %c0_36 = arith.constant 0 : index
    %c0_37 = arith.constant 0 : index
    %48 = vector.load %arg7[%c1_35, %c0_36, %c0_37] : memref<3x32x16xf32, #tpu.memory_space<vmem>>, vector<1x32x16xf32>
    %49 = vector.shape_cast %48 : vector<1x32x16xf32> to vector<32x16xf32>
    %cst_38 = arith.constant dense<0.000000e+00> : vector<1x16xf32>
    %50 = tpu.matmul %47, %49, %cst_38 {dimension_numbers = #tpu.dot_dimension_numbers<[1], [0], [0], [1], [0, 0, 1, 1], [], []>} : vector<1x32xf32>, vector<32x16xf32>, vector<1x16xf32> -> vector<1x16xf32>
    %c1_39 = arith.constant 1 : index
    %c0_40 = arith.constant 0 : index
    %c0_41 = arith.constant 0 : index
    %51 = vector.load %arg8[%c1_39, %c0_40, %c0_41] : memref<3x1x16xf32, #tpu.memory_space<vmem>>, vector<1x1x16xf32>
    %52 = vector.shape_cast %51 : vector<1x1x16xf32> to vector<1x16xf32>
    %53 = arith.addf %50, %52 : vector<1x16xf32>
    %c2_i32 = arith.constant 2 : i32
    %54 = vector.broadcast %c2_i32 : i32 to vector<4x1xi32>
    %55 = arith.cmpi eq, %15, %54 : vector<4x1xi32>
    %56 = vector.shape_cast %55 : vector<4x1xi1> to vector<4x1xi1>
    %57 = vector.broadcast %56 : vector<4x1xi1> to vector<4x16xi1>
    %58 = vector.shape_cast %53 : vector<1x16xf32> to vector<1x16xf32>
    %59 = vector.broadcast %58 : vector<1x16xf32> to vector<4x16xf32>
    %60 = arith.select %57, %59, %38 : vector<4x16xi1>, vector<4x16xf32>
    %61 = vector.extract_strided_slice %14 {offsets = [2, 0], sizes = [1, 32], strides = [1, 1]} : vector<3x32xf32> to vector<1x32xf32>
    %c2 = arith.constant 2 : index
    %c0_42 = arith.constant 0 : index
    %c0_43 = arith.constant 0 : index
    %62 = vector.load %arg5[%c2, %c0_42, %c0_43] : memref<3x32x32xf32, #tpu.memory_space<vmem>>, vector<1x32x32xf32>
    %63 = vector.shape_cast %62 : vector<1x32x32xf32> to vector<32x32xf32>
    %cst_44 = arith.constant dense<0.000000e+00> : vector<1x32xf32>
    %64 = tpu.matmul %61, %63, %cst_44 {dimension_numbers = #tpu.dot_dimension_numbers<[1], [0], [0], [1], [0, 0, 1, 1], [], []>} : vector<1x32xf32>, vector<32x32xf32>, vector<1x32xf32> -> vector<1x32xf32>
    %c2_45 = arith.constant 2 : index
    %c0_46 = arith.constant 0 : index
    %c0_47 = arith.constant 0 : index
    %65 = vector.load %arg6[%c2_45, %c0_46, %c0_47] : memref<3x1x32xf32, #tpu.memory_space<vmem>>, vector<1x1x32xf32>
    %66 = vector.shape_cast %65 : vector<1x1x32xf32> to vector<1x32xf32>
    %67 = arith.addf %64, %66 : vector<1x32xf32>
    %cst_48 = arith.constant 0.000000e+00 : f32
    %68 = vector.broadcast %cst_48 : f32 to vector<1x32xf32>
    %69 = arith.maximumf %67, %68 : vector<1x32xf32>
    %c2_49 = arith.constant 2 : index
    %c0_50 = arith.constant 0 : index
    %c0_51 = arith.constant 0 : index
    %70 = vector.load %arg7[%c2_49, %c0_50, %c0_51] : memref<3x32x16xf32, #tpu.memory_space<vmem>>, vector<1x32x16xf32>
    %71 = vector.shape_cast %70 : vector<1x32x16xf32> to vector<32x16xf32>
    %cst_52 = arith.constant dense<0.000000e+00> : vector<1x16xf32>
    %72 = tpu.matmul %69, %71, %cst_52 {dimension_numbers = #tpu.dot_dimension_numbers<[1], [0], [0], [1], [0, 0, 1, 1], [], []>} : vector<1x32xf32>, vector<32x16xf32>, vector<1x16xf32> -> vector<1x16xf32>
    %c2_53 = arith.constant 2 : index
    %c0_54 = arith.constant 0 : index
    %c0_55 = arith.constant 0 : index
    %73 = vector.load %arg8[%c2_53, %c0_54, %c0_55] : memref<3x1x16xf32, #tpu.memory_space<vmem>>, vector<1x1x16xf32>
    %74 = vector.shape_cast %73 : vector<1x1x16xf32> to vector<1x16xf32>
    %75 = arith.addf %72, %74 : vector<1x16xf32>
    %c3_i32 = arith.constant 3 : i32
    %76 = vector.broadcast %c3_i32 : i32 to vector<4x1xi32>
    %77 = arith.cmpi eq, %15, %76 : vector<4x1xi32>
    %78 = vector.shape_cast %77 : vector<4x1xi1> to vector<4x1xi1>
    %79 = vector.broadcast %78 : vector<4x1xi1> to vector<4x16xi1>
    %80 = vector.shape_cast %75 : vector<1x16xf32> to vector<1x16xf32>
    %81 = vector.broadcast %80 : vector<1x16xf32> to vector<4x16xf32>
    %82 = arith.select %79, %81, %60 : vector<4x16xi1>, vector<4x16xf32>
    %c0_56 = arith.constant 0 : index
    %c0_57 = arith.constant 0 : index
    %83 = vector.load %arg9[%c0_56, %c0_57] : memref<16x32xf32, #tpu.memory_space<vmem>>, vector<16x32xf32>
    %cst_58 = arith.constant dense<0.000000e+00> : vector<4x32xf32>
    %84 = tpu.matmul %82, %83, %cst_58 {dimension_numbers = #tpu.dot_dimension_numbers<[1], [0], [0], [1], [0, 0, 1, 1], [], []>} : vector<4x16xf32>, vector<16x32xf32>, vector<4x32xf32> -> vector<4x32xf32>
    %c0_59 = arith.constant 0 : index
    %c0_60 = arith.constant 0 : index
    %85 = vector.load %arg10[%c0_59, %c0_60] : memref<1x32xf32, #tpu.memory_space<vmem>>, vector<1x32xf32>
    %86 = vector.broadcast %85 : vector<1x32xf32> to vector<4x32xf32>
    %87 = arith.addf %84, %86 : vector<4x32xf32>
    %cst_61 = arith.constant 0.000000e+00 : f32
    %88 = vector.broadcast %cst_61 : f32 to vector<4x32xf32>
    %89 = arith.maximumf %87, %88 : vector<4x32xf32>
    %c0_62 = arith.constant 0 : index
    %c0_63 = arith.constant 0 : index
    %90 = vector.load %arg11[%c0_62, %c0_63] : memref<32x16xf32, #tpu.memory_space<vmem>>, vector<32x16xf32>
    %cst_64 = arith.constant dense<0.000000e+00> : vector<4x16xf32>
    %91 = tpu.matmul %89, %90, %cst_64 {dimension_numbers = #tpu.dot_dimension_numbers<[1], [0], [0], [1], [0, 0, 1, 1], [], []>} : vector<4x32xf32>, vector<32x16xf32>, vector<4x16xf32> -> vector<4x16xf32>
    %c0_65 = arith.constant 0 : index
    %c0_66 = arith.constant 0 : index
    %92 = vector.load %arg12[%c0_65, %c0_66] : memref<1x16xf32, #tpu.memory_space<vmem>>, vector<1x16xf32>
    %93 = vector.broadcast %92 : vector<1x16xf32> to vector<4x16xf32>
    %94 = arith.addf %91, %93 : vector<4x16xf32>
    %cst_67 = arith.constant 0.000000e+00 : f32
    %95 = vector.broadcast %cst_67 : f32 to vector<4x16xf32>
    %96 = arith.maximumf %94, %95 : vector<4x16xf32>
    %c0_68 = arith.constant 0 : index
    %c0_69 = arith.constant 0 : index
    %97 = vector.load %arg13[%c0_68, %c0_69] : memref<16x1xf32, #tpu.memory_space<vmem>>, vector<16x1xf32>
    %cst_70 = arith.constant dense<0.000000e+00> : vector<4x1xf32>
    %98 = tpu.matmul %96, %97, %cst_70 {dimension_numbers = #tpu.dot_dimension_numbers<[1], [0], [0], [1], [0, 0, 1, 1], [], []>} : vector<4x16xf32>, vector<16x1xf32>, vector<4x1xf32> -> vector<4x1xf32>
    %c0_71 = arith.constant 0 : index
    %c0_72 = arith.constant 0 : index
    %99 = vector.load %arg14[%c0_71, %c0_72] : memref<1x1xf32, #tpu.memory_space<vmem>>, vector<1x1xf32>
    %100 = vector.broadcast %99 : vector<1x1xf32> to vector<4x1xf32>
    %101 = arith.addf %98, %100 : vector<4x1xf32>
    %cst_73 = arith.constant 5.000000e-01 : f32
    %102 = vector.broadcast %cst_73 : f32 to vector<4x1xf32>
    %103 = arith.mulf %102, %101 : vector<4x1xf32>
    %104 = math.tanh %103 : vector<4x1xf32>
    %cst_74 = arith.constant 1.000000e+00 : f32
    %105 = vector.broadcast %cst_74 : f32 to vector<4x1xf32>
    %106 = arith.addf %104, %105 : vector<4x1xf32>
    %cst_75 = arith.constant 5.000000e-01 : f32
    %107 = vector.broadcast %cst_75 : f32 to vector<4x1xf32>
    %108 = arith.mulf %107, %106 : vector<4x1xf32>
    %c0_76 = arith.constant 0 : index
    %c0_77 = arith.constant 0 : index
    %109 = vector.load %arg15[%c0_76, %c0_77] : memref<4x1xf32, #tpu.memory_space<vmem>>, vector<4x1xf32>
    tpu.vector_store %arg15[%c0_76, %c0_77], %108 {strides = array<i32>} : memref<4x1xf32, #tpu.memory_space<vmem>>, vector<4x1xf32>,
    return
  }
}

</mosaic_0001>

<llo_original>
// kernel: tpu_custom_call.1
$region0: #{tpu_custom_call.1}
  #allocation0 [shape = 'u32[]', space=smem, size = 0x4, offset = 0x4, fixed_abs, tag = 'smem constant byte address 0x4 - core index']
  #allocation1 [shape = 'u32[144,128]{1,0:T(1,128)}', space=vmem, size = 0x12000, scoped, tag = 'internal scratch']
  #allocation2 [shape = 'f32[1,1]{1,0:T(1,128)S(1)}', space=vmem, size = 0x200, scoped, tag = 'scoped memory for tpu_custom_call.1']
  %s0 = inlined_call_operand.vmem [shape: f32[3,152], index: 0, kind: input, shape index: {}]
  %s1 = inlined_call_operand.vmem [shape: f32[152,32], index: 1, kind: input, shape index: {}]
  %s2 = inlined_call_operand.vmem [shape: f32[1,32], index: 2, kind: input, shape index: {}]
  %s3 = inlined_call_operand.vmem [shape: f32[32,32], index: 3, kind: input, shape index: {}]
  %s4 = inlined_call_operand.vmem [shape: f32[1,32], index: 4, kind: input, shape index: {}]
  %s5 = inlined_call_operand.vmem [shape: f32[3,32,32], index: 5, kind: input, shape index: {}]
  %s6 = inlined_call_operand.vmem [shape: f32[3,1,32], index: 6, kind: input, shape index: {}]
  %s7 = inlined_call_operand.vmem [shape: f32[3,32,16], index: 7, kind: input, shape index: {}]
  %s8 = inlined_call_operand.vmem [shape: f32[3,1,16], index: 8, kind: input, shape index: {}]
  %s9 = inlined_call_operand.vmem [shape: f32[16,32], index: 9, kind: input, shape index: {}]
  %s10 = inlined_call_operand.vmem [shape: f32[1,32], index: 10, kind: input, shape index: {}]
  %s11 = inlined_call_operand.vmem [shape: f32[32,16], index: 11, kind: input, shape index: {}]
  %s12 = inlined_call_operand.vmem [shape: f32[1,16], index: 12, kind: input, shape index: {}]
  %s13 = inlined_call_operand.vmem [shape: f32[16,1], index: 13, kind: input, shape index: {}]
  %s14 = inlined_call_operand.<no memory space> [shape: f32[1,1], index: 14, kind: input, shape index: {}]
  %s15 = inlined_call_operand.vmem [shape: f32[4,1], index: 15, kind: output, shape index: {}]
  %s16 = sld [smem:[#allocation0]]
  $region70: #{tpu_custom_call.1} parent=0
    _
  %s18 = ssub.s32 1, %s16
  %s19 = scalar_select 0, %s18, %s16
  %v20 = vstv %s14
  %21 = vst [vmem:[#allocation2] sm:$0x1] %v20
  // Predicated region
  $region2: #{tpu_custom_call.1} parent=0 // pred_check
    _
  $region3: #{tpu_custom_call.1} parent=0 // pred_check_branch
    %23 = sbr.rel (0) target = $region5
  $region4: #{tpu_custom_call.1} parent=0 // pred_region
    _
  $region5: #{tpu_custom_call.1} parent=0 // pred_fallthru
    _
  // Predicated region
  $region6: #{tpu_custom_call.1} parent=0 // pred_check
    _
  $region7: #{tpu_custom_call.1} parent=0 // pred_check_branch
    %25 = sbr.rel (0) target = $region9
  $region8: #{tpu_custom_call.1} parent=0 // pred_region
    _
  $region9: #{tpu_custom_call.1} parent=0 // pred_fallthru
    _
  // Predicated region
  $region10: #{tpu_custom_call.1} parent=0 // pred_check
    _
  $region11: #{tpu_custom_call.1} parent=0 // pred_check_branch
    %27 = sbr.rel (0) target = $region13
  $region12: #{tpu_custom_call.1} parent=0 // pred_region
    _
  $region13: #{tpu_custom_call.1} parent=0 // pred_fallthru
    _
  // Predicated region
  $region14: #{tpu_custom_call.1} parent=0 // pred_check
    _
  $region15: #{tpu_custom_call.1} parent=0 // pred_check_branch
    %29 = sbr.rel (0) target = $region17
  $region16: #{tpu_custom_call.1} parent=0 // pred_region
    _
  $region17: #{tpu_custom_call.1} parent=0 // pred_fallthru
    _
  // Predicated region
  $region18: #{tpu_custom_call.1} parent=0 // pred_check
    _
  $region19: #{tpu_custom_call.1} parent=0 // pred_check_branch
    %31 = sbr.rel (0) target = $region21
  $region20: #{tpu_custom_call.1} parent=0 // pred_region
    _
  $region21: #{tpu_custom_call.1} parent=0 // pred_fallthru
    _
  // Predicated region
  $region22: #{tpu_custom_call.1} parent=0 // pred_check
    _
  $region23: #{tpu_custom_call.1} parent=0 // pred_check_branch
    %33 = sbr.rel (0) target = $region25
  $region24: #{tpu_custom_call.1} parent=0 // pred_region
    _
  $region25: #{tpu_custom_call.1} parent=0 // pred_fallthru
    _
  // Predicated region
  $region26: #{tpu_custom_call.1} parent=0 // pred_check
    _
  $region27: #{tpu_custom_call.1} parent=0 // pred_check_branch
    %35 = sbr.rel (0) target = $region29
  $region28: #{tpu_custom_call.1} parent=0 // pred_region
    _
  $region29: #{tpu_custom_call.1} parent=0 // pred_fallthru
    _
  // Predicated region
  $region30: #{tpu_custom_call.1} parent=0 // pred_check
    _
  $region31: #{tpu_custom_call.1} parent=0 // pred_check_branch
    %37 = sbr.rel (0) target = $region33
  $region32: #{tpu_custom_call.1} parent=0 // pred_region
    _
  $region33: #{tpu_custom_call.1} parent=0 // pred_fallthru
    _
  // Predicated region
  $region34: #{tpu_custom_call.1} parent=0 // pred_check
    _
  $region35: #{tpu_custom_call.1} parent=0 // pred_check_branch
    %39 = sbr.rel (0) target = $region37
  $region36: #{tpu_custom_call.1} parent=0 // pred_region
    _
  $region37: #{tpu_custom_call.1} parent=0 // pred_fallthru
    _
  // Predicated region
  $region38: #{tpu_custom_call.1} parent=0 // pred_check
    _
  $region39: #{tpu_custom_call.1} parent=0 // pred_check_branch
    %41 = sbr.rel (0) target = $region41
  $region40: #{tpu_custom_call.1} parent=0 // pred_region
    _
  $region41: #{tpu_custom_call.1} parent=0 // pred_fallthru
    _
  // Predicated region
  $region42: #{tpu_custom_call.1} parent=0 // pred_check
    _
  $region43: #{tpu_custom_call.1} parent=0 // pred_check_branch
    %43 = sbr.rel (0) target = $region45
  $region44: #{tpu_custom_call.1} parent=0 // pred_region
    _
  $region45: #{tpu_custom_call.1} parent=0 // pred_fallthru
    _
  // Predicated region
  $region46: #{tpu_custom_call.1} parent=0 // pred_check
    _
  $region47: #{tpu_custom_call.1} parent=0 // pred_check_branch
    %45 = sbr.rel (0) target = $region49
  $region48: #{tpu_custom_call.1} parent=0 // pred_region
    _
  $region49: #{tpu_custom_call.1} parent=0 // pred_fallthru
    _
  // Predicated region
  $region50: #{tpu_custom_call.1} parent=0 // pred_check
    _
  $region51: #{tpu_custom_call.1} parent=0 // pred_check_branch
    %47 = sbr.rel (0) target = $region53
  $region52: #{tpu_custom_call.1} parent=0 // pred_region
    _
  $region53: #{tpu_custom_call.1} parent=0 // pred_fallthru
    _
  // Predicated region
  $region54: #{tpu_custom_call.1} parent=0 // pred_check
    _
  $region55: #{tpu_custom_call.1} parent=0 // pred_check_branch
    %49 = sbr.rel (0) target = $region57
  $region56: #{tpu_custom_call.1} parent=0 // pred_region
    _
  $region57: #{tpu_custom_call.1} parent=0 // pred_fallthru
    _
  // Predicated region
  $region58: #{tpu_custom_call.1} parent=0 // pred_check
    _
  $region59: #{tpu_custom_call.1} parent=0 // pred_check_branch
    %51 = sbr.rel (0) target = $region61
  $region60: #{tpu_custom_call.1} parent=0 // pred_region
    _
  $region61: #{tpu_custom_call.1} parent=0 // pred_fallthru
    _
  %v52 = vld [vmem:[%s0] sm:$0x77]
  %v53 = vld [vmem:[%s1] sm:$0xff]
  %v54 = vld [vmem:[%s1 + $0x8] sm:$0xff]
  %v55 = vld [vmem:[%s1 + $0x10] sm:$0xff]
  %v56 = vld [vmem:[%s1 + $0x18] sm:$0xff]
  %v57 = vld [vmem:[%s1 + $0x20] sm:$0xff]
  %v58 = vld [vmem:[%s1 + $0x28] sm:$0xff]
  %v59 = vld [vmem:[%s1 + $0x30] sm:$0xff]
  %v60 = vld [vmem:[%s1 + $0x38] sm:$0xff]
  %v61 = vld [vmem:[%s1 + $0x40] sm:$0xff]
  %v62 = vld [vmem:[%s1 + $0x48] sm:$0xff]
  %v63 = vld [vmem:[%s1 + $0x50] sm:$0xff]
  %v64 = vld [vmem:[%s1 + $0x58] sm:$0xff]
  %v65 = vld [vmem:[%s1 + $0x60] sm:$0xff]
  %v66 = vld [vmem:[%s1 + $0x68] sm:$0xff]
  %v67 = vld [vmem:[%s1 + $0x70] sm:$0xff]
  %v68 = vld [vmem:[%s1 + $0x78] sm:$0xff]
  %v69 = vld [vmem:[%s1 + $0x80] sm:$0xff]
  %v70 = vld [vmem:[%s1 + $0x88] sm:$0xff]
  %v71 = vld [vmem:[%s1 + $0x90] sm:$0xff]
  %v72 = vld [vmem:[%s2] sm:$0x1]
  %v74 = vlaneseq
  %v75 = vshrl.u32 %v74, 7
  %v76 = vsub.s32 0, %v75
  %v77 = vrot.slane %v72, %v76
  %v80 = vcombine.high %v52, %v52
  %vm81 = vcmask 195584
  %v82 = vsel %vm81, %v80, 0
  %84 = vmatprep.subr.mxu0 0.0
  %85 = vmatpush1.msra.mxu0 %v53
  %86 = vmatprep.subr.mxu0 0.0
  %87 = vmatpush1.msra.mxu0 %v54
  %88 = vmatprep.subr.mxu0 0.0
  %89 = vmatpush1.msra.mxu0 %v55
  %90 = vmatprep.subr.mxu0 0.0
  %91 = vmatpush1.msra.mxu0 %v56
  %92 = vmatprep.subr.mxu0 0.0
  %93 = vmatpush1.msra.mxu0 %v57
  %94 = vmatprep.subr.mxu0 0.0
  %95 = vmatpush1.msra.mxu0 %v58
  %96 = vmatprep.subr.mxu0 0.0
  %97 = vmatpush1.msra.mxu0 %v59
  %98 = vmatprep.subr.mxu0 0.0
  %99 = vmatpush1.msra.mxu0 %v60
  %100 = vmatprep.subr.mxu0 0.0
  %101 = vmatpush1.msra.mxu0 %v61
  %102 = vmatprep.subr.mxu0 0.0
  %103 = vmatpush1.msra.mxu0 %v62
  %104 = vmatprep.subr.mxu0 0.0
  %105 = vmatpush1.msra.mxu0 %v63
  %106 = vmatprep.subr.mxu0 0.0
  %107 = vmatpush1.msra.mxu0 %v64
  %108 = vmatprep.subr.mxu0 0.0
  %109 = vmatpush1.msra.mxu0 %v65
  %110 = vmatprep.subr.mxu0 0.0
  %111 = vmatpush1.msra.mxu0 %v66
  %112 = vmatprep.subr.mxu0 0.0
  %113 = vmatpush1.msra.mxu0 %v67
  %114 = vmatprep.subr.mxu0 0.0
  %115 = vmatpush1.msra.mxu0 %v68
  %116 = vmatprep.subr.mxu0 0.0
  %117 = vmatpush1.msra.mxu0 %v69
  %118 = vmatprep.subr.mxu0 0.0
  %119 = vmatpush1.msra.mxu0 %v70
  %120 = vmatprep.subr.mxu0 0.0
  %121 = vmatpush1.msra.mxu0 %v71
  %122 = vmatprep.subr.mxu0 0.0
  %123 = vmatpush1.msra.mxu0 0.0
  %124 = vmatprep.subr.mxu0 0.0
  %125 = vmatpush1.msra.mxu0 0.0
  %126 = vmatprep.subr.mxu0 0.0
  %127 = vmatpush1.msra.mxu0 0.0
  %128 = vmatprep.subr.mxu0 0.0
  %129 = vmatpush1.msra.mxu0 0.0
  %130 = vmatprep.subr.mxu0 0.0
  %131 = vmatpush1.msra.mxu0 0.0
  %132 = vmatprep.subr.mxu0 0.0
  %133 = vmatpush1.msra.mxu0 0.0
  %134 = vmatprep.subr.mxu0 0.0
  %135 = vmatpush1.msra.mxu0 0.0
  %136 = vmatprep.subr.mxu0 0.0
  %137 = vmatpush1.msra.mxu0 0.0
  %138 = vmatprep.subr.mxu0 0.0
  %139 = vmatpush1.msra.mxu0 0.0
  %140 = vmatprep.subr.mxu0 0.0
  %141 = vmatpush1.msra.mxu0 0.0
  %142 = vmatprep.subr.mxu0 0.0
  %143 = vmatpush1.msra.mxu0 0.0
  %144 = vmatprep.subr.mxu0 0.0
  %145 = vmatpush1.msra.mxu0 0.0
  %146 = vmatprep.subr.mxu0 0.0
  %147 = vmatpush1.msra.mxu0 0.0
  %148 = vmatprep.mubr.f32.mxu0 %v82
  %149 = vmatmul.mubr.f32.gmra.mrb[0].mxu0 %v52
  %v150 = vpop.f32.mrb[0].mxu0
  %v151 = vadd.f32 %v77, %v150
  %v152 = vpop.f32.mrb[0].mxu0
  %153 = vdwg.mxu0
  %v154 = vmax.f32 %v151, 0.0
  %v155 = vld [vmem:[%s3] sm:$0xff]
  %v156 = vld [vmem:[%s3 + $0x8] sm:$0xff]
  %v157 = vld [vmem:[%s3 + $0x10] sm:$0xff]
  %v158 = vld [vmem:[%s3 + $0x18] sm:$0xff]
  %v159 = vld [vmem:[%s4] sm:$0x1]
  %v161 = vlaneseq
  %v162 = vshrl.u32 %v161, 7
  %v163 = vsub.s32 0, %v162
  %v164 = vrot.slane %v159, %v163
  %vm166 = vcmask 261120
  %v168 = vsel %vm166, %v154, 0
  %170 = vmatprep.subr.mxu0 0.0
  %171 = vmatpush1.msra.mxu0 %v155
  %172 = vmatprep.subr.mxu0 0.0
  %173 = vmatpush1.msra.mxu0 %v156
  %174 = vmatprep.subr.mxu0 0.0
  %175 = vmatpush1.msra.mxu0 %v157
  %176 = vmatprep.subr.mxu0 0.0
  %177 = vmatpush1.msra.mxu0 %v158
  %178 = vmatprep.subr.mxu0 0.0
  %179 = vmatpush1.msra.mxu0 0.0
  %180 = vmatprep.subr.mxu0 0.0
  %181 = vmatpush1.msra.mxu0 0.0
  %182 = vmatprep.subr.mxu0 0.0
  %183 = vmatpush1.msra.mxu0 0.0
  %184 = vmatprep.subr.mxu0 0.0
  %185 = vmatpush1.msra.mxu0 0.0
  %186 = vmatprep.subr.mxu0 0.0
  %187 = vmatpush1.msra.mxu0 0.0
  %188 = vmatprep.subr.mxu0 0.0
  %189 = vmatpush1.msra.mxu0 0.0
  %190 = vmatprep.subr.mxu0 0.0
  %191 = vmatpush1.msra.mxu0 0.0
  %192 = vmatprep.subr.mxu0 0.0
  %193 = vmatpush1.msra.mxu0 0.0
  %194 = vmatprep.subr.mxu0 0.0
  %195 = vmatpush1.msra.mxu0 0.0
  %196 = vmatprep.subr.mxu0 0.0
  %197 = vmatpush1.msra.mxu0 0.0
  %198 = vmatprep.subr.mxu0 0.0
  %199 = vmatpush1.msra.mxu0 0.0
  %200 = vmatprep.subr.mxu0 0.0
  %201 = vmatpush1.msra.mxu0 0.0
  %202 = vmatprep.subr.mxu0 0.0
  %203 = vmatpush1.msra.mxu0 0.0
  %204 = vmatprep.subr.mxu0 0.0
  %205 = vmatpush1.msra.mxu0 0.0
  %206 = vmatprep.subr.mxu0 0.0
  %207 = vmatpush1.msra.mxu0 0.0
  %208 = vmatprep.subr.mxu0 0.0
  %209 = vmatpush1.msra.mxu0 0.0
  %210 = vmatprep.subr.mxu0 0.0
  %211 = vmatpush1.msra.mxu0 0.0
  %212 = vmatprep.subr.mxu0 0.0
  %213 = vmatpush1.msra.mxu0 0.0
  %214 = vmatprep.subr.mxu0 0.0
  %215 = vmatpush1.msra.mxu0 0.0
  %216 = vmatprep.subr.mxu0 0.0
  %217 = vmatpush1.msra.mxu0 0.0
  %218 = vmatprep.subr.mxu0 0.0
  %219 = vmatpush1.msra.mxu0 0.0
  %220 = vmatprep.subr.mxu0 0.0
  %221 = vmatpush1.msra.mxu0 0.0
  %222 = vmatprep.subr.mxu0 0.0
  %223 = vmatpush1.msra.mxu0 0.0
  %224 = vmatprep.subr.mxu0 0.0
  %225 = vmatpush1.msra.mxu0 0.0
  %226 = vmatprep.subr.mxu0 0.0
  %227 = vmatpush1.msra.mxu0 0.0
  %228 = vmatprep.subr.mxu0 0.0
  %229 = vmatpush1.msra.mxu0 0.0
  %230 = vmatprep.subr.mxu0 0.0
  %231 = vmatpush1.msra.mxu0 0.0
  %232 = vmatprep.subr.mxu0 0.0
  %233 = vmatpush1.msra.mxu0 0.0
  %234 = vmatprep.mubr.f32.mxu0 0.0
  %235 = vmatmul.mubr.f32.gmra.mrb[0].mxu0 %v168
  %v236 = vpop.f32.mrb[0].mxu0
  %v237 = vadd.f32 %v164, %v236
  %v238 = vpop.f32.mrb[0].mxu0
  %239 = vdwg.mxu0
  %v240 = vmax.f32 %v237, 0.0
  %v241 = vlaneseq
  %v242 = vshrl.u32 %v241, 7
  %v243 = vld [vmem:[%s5] sm:$0xff]
  %v244 = vld [vmem:[%s5 + $0x8] sm:$0xff]
  %v245 = vld [vmem:[%s5 + $0x10] sm:$0xff]
  %v246 = vld [vmem:[%s5 + $0x18] sm:$0xff]
  %v247 = vld [vmem:[%s6] sm:$0x1]
  %v249 = vsel %vm166, %v240, 0
  %251 = vmatprep.subr.mxu0 0.0
  %252 = vmatpush1.msra.mxu0 %v243
  %253 = vmatprep.subr.mxu0 0.0
  %254 = vmatpush1.msra.mxu0 %v244
  %255 = vmatprep.subr.mxu0 0.0
  %256 = vmatpush1.msra.mxu0 %v245
  %257 = vmatprep.subr.mxu0 0.0
  %258 = vmatpush1.msra.mxu0 %v246
  %259 = vmatprep.subr.mxu0 0.0
  %260 = vmatpush1.msra.mxu0 0.0
  %261 = vmatprep.subr.mxu0 0.0
  %262 = vmatpush1.msra.mxu0 0.0
  %263 = vmatprep.subr.mxu0 0.0
  %264 = vmatpush1.msra.mxu0 0.0
  %265 = vmatprep.subr.mxu0 0.0
  %266 = vmatpush1.msra.mxu0 0.0
  %267 = vmatprep.subr.mxu0 0.0
  %268 = vmatpush1.msra.mxu0 0.0
  %269 = vmatprep.subr.mxu0 0.0
  %270 = vmatpush1.msra.mxu0 0.0
  %271 = vmatprep.subr.mxu0 0.0
  %272 = vmatpush1.msra.mxu0 0.0
  %273 = vmatprep.subr.mxu0 0.0
  %274 = vmatpush1.msra.mxu0 0.0
  %275 = vmatprep.subr.mxu0 0.0
  %276 = vmatpush1.msra.mxu0 0.0
  %277 = vmatprep.subr.mxu0 0.0
  %278 = vmatpush1.msra.mxu0 0.0
  %279 = vmatprep.subr.mxu0 0.0
  %280 = vmatpush1.msra.mxu0 0.0
  %281 = vmatprep.subr.mxu0 0.0
  %282 = vmatpush1.msra.mxu0 0.0
  %283 = vmatprep.subr.mxu0 0.0
  %284 = vmatpush1.msra.mxu0 0.0
  %285 = vmatprep.subr.mxu0 0.0
  %286 = vmatpush1.msra.mxu0 0.0
  %287 = vmatprep.subr.mxu0 0.0
  %288 = vmatpush1.msra.mxu0 0.0
  %289 = vmatprep.subr.mxu0 0.0
  %290 = vmatpush1.msra.mxu0 0.0
  %291 = vmatprep.subr.mxu0 0.0
  %292 = vmatpush1.msra.mxu0 0.0
  %293 = vmatprep.subr.mxu0 0.0
  %294 = vmatpush1.msra.mxu0 0.0
  %295 = vmatprep.subr.mxu0 0.0
  %296 = vmatpush1.msra.mxu0 0.0
  %297 = vmatprep.subr.mxu0 0.0
  %298 = vmatpush1.msra.mxu0 0.0
  %299 = vmatprep.subr.mxu0 0.0
  %300 = vmatpush1.msra.mxu0 0.0
  %301 = vmatprep.subr.mxu0 0.0
  %302 = vmatpush1.msra.mxu0 0.0
  %303 = vmatprep.subr.mxu0 0.0
  %304 = vmatpush1.msra.mxu0 0.0
  %305 = vmatprep.subr.mxu0 0.0
  %306 = vmatpush1.msra.mxu0 0.0
  %307 = vmatprep.subr.mxu0 0.0
  %308 = vmatpush1.msra.mxu0 0.0
  %309 = vmatprep.subr.mxu0 0.0
  %310 = vmatpush1.msra.mxu0 0.0
  %311 = vmatprep.subr.mxu0 0.0
  %312 = vmatpush1.msra.mxu0 0.0
  %313 = vmatprep.subr.mxu0 0.0
  %314 = vmatpush1.msra.mxu0 0.0
  %315 = vmatprep.mubr.f32.mxu0 0.0
  %316 = vmatmul.mubr.f32.gmra.mrb[0].mxu0 %v249
  %v317 = vpop.f32.mrb[0].mxu0
  %v318 = vadd.f32 %v247, %v317
  %v319 = vpop.f32.mrb[0].mxu0
  %320 = vdwg.mxu0
  %v321 = vmax.f32 %v318, 0.0
  %v322 = vld [vmem:[%s7] sm:$0xff]
  %v323 = vld [vmem:[%s7 + $0x8] sm:$0xff]
  %v324 = vld [vmem:[%s7 + $0x10] sm:$0xff]
  %v325 = vld [vmem:[%s7 + $0x18] sm:$0xff]
  %v326 = vld [vmem:[%s8] sm:$0x1]
  %v328 = vsel %vm166, %v321, 0
  %330 = vmatprep.subr.mxu0 0.0
  %331 = vmatpush1.msra.mxu0 %v322
  %332 = vmatprep.subr.mxu0 0.0
  %333 = vmatpush1.msra.mxu0 %v323
  %334 = vmatprep.subr.mxu0 0.0
  %335 = vmatpush1.msra.mxu0 %v324
  %336 = vmatprep.subr.mxu0 0.0
  %337 = vmatpush1.msra.mxu0 %v325
  %338 = vmatprep.subr.mxu0 0.0
  %339 = vmatpush1.msra.mxu0 0.0
  %340 = vmatprep.subr.mxu0 0.0
  %341 = vmatpush1.msra.mxu0 0.0
  %342 = vmatprep.subr.mxu0 0.0
  %343 = vmatpush1.msra.mxu0 0.0
  %344 = vmatprep.subr.mxu0 0.0
  %345 = vmatpush1.msra.mxu0 0.0
  %346 = vmatprep.subr.mxu0 0.0
  %347 = vmatpush1.msra.mxu0 0.0
  %348 = vmatprep.subr.mxu0 0.0
  %349 = vmatpush1.msra.mxu0 0.0
  %350 = vmatprep.subr.mxu0 0.0
  %351 = vmatpush1.msra.mxu0 0.0
  %352 = vmatprep.subr.mxu0 0.0
  %353 = vmatpush1.msra.mxu0 0.0
  %354 = vmatprep.subr.mxu0 0.0
  %355 = vmatpush1.msra.mxu0 0.0
  %356 = vmatprep.subr.mxu0 0.0
  %357 = vmatpush1.msra.mxu0 0.0
  %358 = vmatprep.subr.mxu0 0.0
  %359 = vmatpush1.msra.mxu0 0.0
  %360 = vmatprep.subr.mxu0 0.0
  %361 = vmatpush1.msra.mxu0 0.0
  %362 = vmatprep.subr.mxu0 0.0
  %363 = vmatpush1.msra.mxu0 0.0
  %364 = vmatprep.subr.mxu0 0.0
  %365 = vmatpush1.msra.mxu0 0.0
  %366 = vmatprep.subr.mxu0 0.0
  %367 = vmatpush1.msra.mxu0 0.0
  %368 = vmatprep.subr.mxu0 0.0
  %369 = vmatpush1.msra.mxu0 0.0
  %370 = vmatprep.subr.mxu0 0.0
  %371 = vmatpush1.msra.mxu0 0.0
  %372 = vmatprep.subr.mxu0 0.0
  %373 = vmatpush1.msra.mxu0 0.0
  %374 = vmatprep.subr.mxu0 0.0
  %375 = vmatpush1.msra.mxu0 0.0
  %376 = vmatprep.subr.mxu0 0.0
  %377 = vmatpush1.msra.mxu0 0.0
  %378 = vmatprep.subr.mxu0 0.0
  %379 = vmatpush1.msra.mxu0 0.0
  %380 = vmatprep.subr.mxu0 0.0
  %381 = vmatpush1.msra.mxu0 0.0
  %382 = vmatprep.subr.mxu0 0.0
  %383 = vmatpush1.msra.mxu0 0.0
  %384 = vmatprep.subr.mxu0 0.0
  %385 = vmatpush1.msra.mxu0 0.0
  %386 = vmatprep.subr.mxu0 0.0
  %387 = vmatpush1.msra.mxu0 0.0
  %388 = vmatprep.subr.mxu0 0.0
  %389 = vmatpush1.msra.mxu0 0.0
  %390 = vmatprep.subr.mxu0 0.0
  %391 = vmatpush1.msra.mxu0 0.0
  %392 = vmatprep.subr.mxu0 0.0
  %393 = vmatpush1.msra.mxu0 0.0
  %394 = vmatprep.mubr.f32.mxu0 0.0
  %395 = vmatmul.mubr.f32.gmra.mrb[0].mxu0 %v328
  %v396 = vpop.f32.mrb[0].mxu0
  %v397 = vadd.f32 %v326, %v396
  %v398 = vpop.f32.mrb[0].mxu0
  %399 = vdwg.mxu0
  %vm400 = vcmp.eq.s32.totalorder %v242, 1
  %v401 = vsel %vm400, 1, 0
  %vm402 = vcmp.eq.s32.totalorder %v401, 1
  %v403 = vlaneseq
  %v404 = vshrl.u32 %v403, 7
  %v405 = vsub.s32 0, %v404
  %v406 = vrot.slane %v397, %v405
  %v407 = vsel %vm402, %v406, 0.0
  %s408 = scalar_lea.vmem %s5, 32
  %v409 = vld [vmem:[%s408] sm:$0xff]
  %v410 = vld [vmem:[%s408 + $0x8] sm:$0xff]
  %v411 = vld [vmem:[%s408 + $0x10] sm:$0xff]
  %v412 = vld [vmem:[%s408 + $0x18] sm:$0xff]
  %s413 = scalar_lea.vmem %s6, 1
  %v414 = vld [vmem:[%s413] sm:$0x1]
  %v415 = vrot.slane %v240, 1
  %v416 = vsel %vm166, %v415, 0
  %418 = vmatprep.subr.mxu0 0.0
  %419 = vmatpush1.msra.mxu0 %v409
  %420 = vmatprep.subr.mxu0 0.0
  %421 = vmatpush1.msra.mxu0 %v410
  %422 = vmatprep.subr.mxu0 0.0
  %423 = vmatpush1.msra.mxu0 %v411
  %424 = vmatprep.subr.mxu0 0.0
  %425 = vmatpush1.msra.mxu0 %v412
  %426 = vmatprep.subr.mxu0 0.0
  %427 = vmatpush1.msra.mxu0 0.0
  %428 = vmatprep.subr.mxu0 0.0
  %429 = vmatpush1.msra.mxu0 0.0
  %430 = vmatprep.subr.mxu0 0.0
  %431 = vmatpush1.msra.mxu0 0.0
  %432 = vmatprep.subr.mxu0 0.0
  %433 = vmatpush1.msra.mxu0 0.0
  %434 = vmatprep.subr.mxu0 0.0
  %435 = vmatpush1.msra.mxu0 0.0
  %436 = vmatprep.subr.mxu0 0.0
  %437 = vmatpush1.msra.mxu0 0.0
  %438 = vmatprep.subr.mxu0 0.0
  %439 = vmatpush1.msra.mxu0 0.0
  %440 = vmatprep.subr.mxu0 0.0
  %441 = vmatpush1.msra.mxu0 0.0
  %442 = vmatprep.subr.mxu0 0.0
  %443 = vmatpush1.msra.mxu0 0.0
  %444 = vmatprep.subr.mxu0 0.0
  %445 = vmatpush1.msra.mxu0 0.0
  %446 = vmatprep.subr.mxu0 0.0
  %447 = vmatpush1.msra.mxu0 0.0
  %448 = vmatprep.subr.mxu0 0.0
  %449 = vmatpush1.msra.mxu0 0.0
  %450 = vmatprep.subr.mxu0 0.0
  %451 = vmatpush1.msra.mxu0 0.0
  %452 = vmatprep.subr.mxu0 0.0
  %453 = vmatpush1.msra.mxu0 0.0
  %454 = vmatprep.subr.mxu0 0.0
  %455 = vmatpush1.msra.mxu0 0.0
  %456 = vmatprep.subr.mxu0 0.0
  %457 = vmatpush1.msra.mxu0 0.0
  %458 = vmatprep.subr.mxu0 0.0
  %459 = vmatpush1.msra.mxu0 0.0
  %460 = vmatprep.subr.mxu0 0.0
  %461 = vmatpush1.msra.mxu0 0.0
  %462 = vmatprep.subr.mxu0 0.0
  %463 = vmatpush1.msra.mxu0 0.0
  %464 = vmatprep.subr.mxu0 0.0
  %465 = vmatpush1.msra.mxu0 0.0
  %466 = vmatprep.subr.mxu0 0.0
  %467 = vmatpush1.msra.mxu0 0.0
  %468 = vmatprep.subr.mxu0 0.0
  %469 = vmatpush1.msra.mxu0 0.0
  %470 = vmatprep.subr.mxu0 0.0
  %471 = vmatpush1.msra.mxu0 0.0
  %472 = vmatprep.subr.mxu0 0.0
  %473 = vmatpush1.msra.mxu0 0.0
  %474 = vmatprep.subr.mxu0 0.0
  %475 = vmatpush1.msra.mxu0 0.0
  %476 = vmatprep.subr.mxu0 0.0
  %477 = vmatpush1.msra.mxu0 0.0
  %478 = vmatprep.subr.mxu0 0.0
  %479 = vmatpush1.msra.mxu0 0.0
  %480 = vmatprep.subr.mxu0 0.0
  %481 = vmatpush1.msra.mxu0 0.0
  %482 = vmatprep.mubr.f32.mxu0 0.0
  %483 = vmatmul.mubr.f32.gmra.mrb[0].mxu0 %v416
  %v484 = vpop.f32.mrb[0].mxu0
  %v485 = vadd.f32 %v414, %v484
  %v486 = vpop.f32.mrb[0].mxu0
  %487 = vdwg.mxu0
  %v488 = vmax.f32 %v485, 0.0
  %s489 = scalar_lea.vmem %s7, 32
  %v490 = vld [vmem:[%s489] sm:$0xff]
  %v491 = vld [vmem:[%s489 + $0x8] sm:$0xff]
  %v492 = vld [vmem:[%s489 + $0x10] sm:$0xff]
  %v493 = vld [vmem:[%s489 + $0x18] sm:$0xff]
  %s494 = scalar_lea.vmem %s8, 1
  %v495 = vld [vmem:[%s494] sm:$0x1]
  %v497 = vsel %vm166, %v488, 0
  %499 = vmatprep.subr.mxu0 0.0
  %500 = vmatpush1.msra.mxu0 %v490
  %501 = vmatprep.subr.mxu0 0.0
  %502 = vmatpush1.msra.mxu0 %v491
  %503 = vmatprep.subr.mxu0 0.0
  %504 = vmatpush1.msra.mxu0 %v492
  %505 = vmatprep.subr.mxu0 0.0
  %506 = vmatpush1.msra.mxu0 %v493
  %507 = vmatprep.subr.mxu0 0.0
  %508 = vmatpush1.msra.mxu0 0.0
  %509 = vmatprep.subr.mxu0 0.0
  %510 = vmatpush1.msra.mxu0 0.0
  %511 = vmatprep.subr.mxu0 0.0
  %512 = vmatpush1.msra.mxu0 0.0
  %513 = vmatprep.subr.mxu0 0.0
  %514 = vmatpush1.msra.mxu0 0.0
  %515 = vmatprep.subr.mxu0 0.0
  %516 = vmatpush1.msra.mxu0 0.0
  %517 = vmatprep.subr.mxu0 0.0
  %518 = vmatpush1.msra.mxu0 0.0
  %519 = vmatprep.subr.mxu0 0.0
  %520 = vmatpush1.msra.mxu0 0.0
  %521 = vmatprep.subr.mxu0 0.0
  %522 = vmatpush1.msra.mxu0 0.0
  %523 = vmatprep.subr.mxu0 0.0
  %524 = vmatpush1.msra.mxu0 0.0
  %525 = vmatprep.subr.mxu0 0.0
  %526 = vmatpush1.msra.mxu0 0.0
  %527 = vmatprep.subr.mxu0 0.0
  %528 = vmatpush1.msra.mxu0 0.0
  %529 = vmatprep.subr.mxu0 0.0
  %530 = vmatpush1.msra.mxu0 0.0
  %531 = vmatprep.subr.mxu0 0.0
  %532 = vmatpush1.msra.mxu0 0.0
  %533 = vmatprep.subr.mxu0 0.0
  %534 = vmatpush1.msra.mxu0 0.0
  %535 = vmatprep.subr.mxu0 0.0
  %536 = vmatpush1.msra.mxu0 0.0
  %537 = vmatprep.subr.mxu0 0.0
  %538 = vmatpush1.msra.mxu0 0.0
  %539 = vmatprep.subr.mxu0 0.0
  %540 = vmatpush1.msra.mxu0 0.0
  %541 = vmatprep.subr.mxu0 0.0
  %542 = vmatpush1.msra.mxu0 0.0
  %543 = vmatprep.subr.mxu0 0.0
  %544 = vmatpush1.msra.mxu0 0.0
  %545 = vmatprep.subr.mxu0 0.0
  %546 = vmatpush1.msra.mxu0 0.0
  %547 = vmatprep.subr.mxu0 0.0
  %548 = vmatpush1.msra.mxu0 0.0
  %549 = vmatprep.subr.mxu0 0.0
  %550 = vmatpush1.msra.mxu0 0.0
  %551 = vmatprep.subr.mxu0 0.0
  %552 = vmatpush1.msra.mxu0 0.0
  %553 = vmatprep.subr.mxu0 0.0
  %554 = vmatpush1.msra.mxu0 0.0
  %555 = vmatprep.subr.mxu0 0.0
  %556 = vmatpush1.msra.mxu0 0.0
  %557 = vmatprep.subr.mxu0 0.0
  %558 = vmatpush1.msra.mxu0 0.0
  %559 = vmatprep.subr.mxu0 0.0
  %560 = vmatpush1.msra.mxu0 0.0
  %561 = vmatprep.subr.mxu0 0.0
  %562 = vmatpush1.msra.mxu0 0.0
  %563 = vmatprep.mubr.f32.mxu0 0.0
  %564 = vmatmul.mubr.f32.gmra.mrb[0].mxu0 %v497
  %v565 = vpop.f32.mrb[0].mxu0
  %v566 = vadd.f32 %v495, %v565
  %v567 = vpop.f32.mrb[0].mxu0
  %568 = vdwg.mxu0
  %vm569 = vcmp.eq.s32.totalorder %v242, 2
  %v570 = vsel %vm569, 1, 0
  %vm571 = vcmp.eq.s32.totalorder %v570, 1
  %v572 = vlaneseq
  %v573 = vshrl.u32 %v572, 7
  %v574 = vsub.s32 0, %v573
  %v575 = vrot.slane %v566, %v574
  %v576 = vsel %vm571, %v575, %v407
  %s577 = scalar_lea.vmem %s5, 64
  %v578 = vld [vmem:[%s577] sm:$0xff]
  %v579 = vld [vmem:[%s577 + $0x8] sm:$0xff]
  %v580 = vld [vmem:[%s577 + $0x10] sm:$0xff]
  %v581 = vld [vmem:[%s577 + $0x18] sm:$0xff]
  %s582 = scalar_lea.vmem %s6, 2
  %v583 = vld [vmem:[%s582] sm:$0x1]
  %v584 = vrot.slane %v240, 2
  %v585 = vsel %vm166, %v584, 0
  %587 = vmatprep.subr.mxu0 0.0
  %588 = vmatpush1.msra.mxu0 %v578
  %589 = vmatprep.subr.mxu0 0.0
  %590 = vmatpush1.msra.mxu0 %v579
  %591 = vmatprep.subr.mxu0 0.0
  %592 = vmatpush1.msra.mxu0 %v580
  %593 = vmatprep.subr.mxu0 0.0
  %594 = vmatpush1.msra.mxu0 %v581
  %595 = vmatprep.subr.mxu0 0.0
  %596 = vmatpush1.msra.mxu0 0.0
  %597 = vmatprep.subr.mxu0 0.0
  %598 = vmatpush1.msra.mxu0 0.0
  %599 = vmatprep.subr.mxu0 0.0
  %600 = vmatpush1.msra.mxu0 0.0
  %601 = vmatprep.subr.mxu0 0.0
  %602 = vmatpush1.msra.mxu0 0.0
  %603 = vmatprep.subr.mxu0 0.0
  %604 = vmatpush1.msra.mxu0 0.0
  %605 = vmatprep.subr.mxu0 0.0
  %606 = vmatpush1.msra.mxu0 0.0
  %607 = vmatprep.subr.mxu0 0.0
  %608 = vmatpush1.msra.mxu0 0.0
  %609 = vmatprep.subr.mxu0 0.0
  %610 = vmatpush1.msra.mxu0 0.0
  %611 = vmatprep.subr.mxu0 0.0
  %612 = vmatpush1.msra.mxu0 0.0
  %613 = vmatprep.subr.mxu0 0.0
  %614 = vmatpush1.msra.mxu0 0.0
  %615 = vmatprep.subr.mxu0 0.0
  %616 = vmatpush1.msra.mxu0 0.0
  %617 = vmatprep.subr.mxu0 0.0
  %618 = vmatpush1.msra.mxu0 0.0
  %619 = vmatprep.subr.mxu0 0.0
  %620 = vmatpush1.msra.mxu0 0.0
  %621 = vmatprep.subr.mxu0 0.0
  %622 = vmatpush1.msra.mxu0 0.0
  %623 = vmatprep.subr.mxu0 0.0
  %624 = vmatpush1.msra.mxu0 0.0
  %625 = vmatprep.subr.mxu0 0.0
  %626 = vmatpush1.msra.mxu0 0.0
  %627 = vmatprep.subr.mxu0 0.0
  %628 = vmatpush1.msra.mxu0 0.0
  %629 = vmatprep.subr.mxu0 0.0
  %630 = vmatpush1.msra.mxu0 0.0
  %631 = vmatprep.subr.mxu0 0.0
  %632 = vmatpush1.msra.mxu0 0.0
  %633 = vmatprep.subr.mxu0 0.0
  %634 = vmatpush1.msra.mxu0 0.0
  %635 = vmatprep.subr.mxu0 0.0
  %636 = vmatpush1.msra.mxu0 0.0
  %637 = vmatprep.subr.mxu0 0.0
  %638 = vmatpush1.msra.mxu0 0.0
  %639 = vmatprep.subr.mxu0 0.0
  %640 = vmatpush1.msra.mxu0 0.0
  %641 = vmatprep.subr.mxu0 0.0
  %642 = vmatpush1.msra.mxu0 0.0
  %643 = vmatprep.subr.mxu0 0.0
  %644 = vmatpush1.msra.mxu0 0.0
  %645 = vmatprep.subr.mxu0 0.0
  %646 = vmatpush1.msra.mxu0 0.0
  %647 = vmatprep.subr.mxu0 0.0
  %648 = vmatpush1.msra.mxu0 0.0
  %649 = vmatprep.subr.mxu0 0.0
  %650 = vmatpush1.msra.mxu0 0.0
  %651 = vmatprep.mubr.f32.mxu0 0.0
  %652 = vmatmul.mubr.f32.gmra.mrb[0].mxu0 %v585
  %v653 = vpop.f32.mrb[0].mxu0
  %v654 = vadd.f32 %v583, %v653
  %v655 = vpop.f32.mrb[0].mxu0
  %656 = vdwg.mxu0
  %v657 = vmax.f32 %v654, 0.0
  %s658 = scalar_lea.vmem %s7, 64
  %v659 = vld [vmem:[%s658] sm:$0xff]
  %v660 = vld [vmem:[%s658 + $0x8] sm:$0xff]
  %v661 = vld [vmem:[%s658 + $0x10] sm:$0xff]
  %v662 = vld [vmem:[%s658 + $0x18] sm:$0xff]
  %s663 = scalar_lea.vmem %s8, 2
  %v664 = vld [vmem:[%s663] sm:$0x1]
  %v666 = vsel %vm166, %v657, 0
  %668 = vmatprep.subr.mxu0 0.0
  %669 = vmatpush1.msra.mxu0 %v659
  %670 = vmatprep.subr.mxu0 0.0
  %671 = vmatpush1.msra.mxu0 %v660
  %672 = vmatprep.subr.mxu0 0.0
  %673 = vmatpush1.msra.mxu0 %v661
  %674 = vmatprep.subr.mxu0 0.0
  %675 = vmatpush1.msra.mxu0 %v662
  %676 = vmatprep.subr.mxu0 0.0
  %677 = vmatpush1.msra.mxu0 0.0
  %678 = vmatprep.subr.mxu0 0.0
  %679 = vmatpush1.msra.mxu0 0.0
  %680 = vmatprep.subr.mxu0 0.0
  %681 = vmatpush1.msra.mxu0 0.0
  %682 = vmatprep.subr.mxu0 0.0
  %683 = vmatpush1.msra.mxu0 0.0
  %684 = vmatprep.subr.mxu0 0.0
  %685 = vmatpush1.msra.mxu0 0.0
  %686 = vmatprep.subr.mxu0 0.0
  %687 = vmatpush1.msra.mxu0 0.0
  %688 = vmatprep.subr.mxu0 0.0
  %689 = vmatpush1.msra.mxu0 0.0
  %690 = vmatprep.subr.mxu0 0.0
  %691 = vmatpush1.msra.mxu0 0.0
  %692 = vmatprep.subr.mxu0 0.0
  %693 = vmatpush1.msra.mxu0 0.0
  %694 = vmatprep.subr.mxu0 0.0
  %695 = vmatpush1.msra.mxu0 0.0
  %696 = vmatprep.subr.mxu0 0.0
  %697 = vmatpush1.msra.mxu0 0.0
  %698 = vmatprep.subr.mxu0 0.0
  %699 = vmatpush1.msra.mxu0 0.0
  %700 = vmatprep.subr.mxu0 0.0
  %701 = vmatpush1.msra.mxu0 0.0
  %702 = vmatprep.subr.mxu0 0.0
  %703 = vmatpush1.msra.mxu0 0.0
  %704 = vmatprep.subr.mxu0 0.0
  %705 = vmatpush1.msra.mxu0 0.0
  %706 = vmatprep.subr.mxu0 0.0
  %707 = vmatpush1.msra.mxu0 0.0
  %708 = vmatprep.subr.mxu0 0.0
  %709 = vmatpush1.msra.mxu0 0.0
  %710 = vmatprep.subr.mxu0 0.0
  %711 = vmatpush1.msra.mxu0 0.0
  %712 = vmatprep.subr.mxu0 0.0
  %713 = vmatpush1.msra.mxu0 0.0
  %714 = vmatprep.subr.mxu0 0.0
  %715 = vmatpush1.msra.mxu0 0.0
  %716 = vmatprep.subr.mxu0 0.0
  %717 = vmatpush1.msra.mxu0 0.0
  %718 = vmatprep.subr.mxu0 0.0
  %719 = vmatpush1.msra.mxu0 0.0
  %720 = vmatprep.subr.mxu0 0.0
  %721 = vmatpush1.msra.mxu0 0.0
  %722 = vmatprep.subr.mxu0 0.0
  %723 = vmatpush1.msra.mxu0 0.0
  %724 = vmatprep.subr.mxu0 0.0
  %725 = vmatpush1.msra.mxu0 0.0
  %726 = vmatprep.subr.mxu0 0.0
  %727 = vmatpush1.msra.mxu0 0.0
  %728 = vmatprep.subr.mxu0 0.0
  %729 = vmatpush1.msra.mxu0 0.0
  %730 = vmatprep.subr.mxu0 0.0
  %731 = vmatpush1.msra.mxu0 0.0
  %732 = vmatprep.mubr.f32.mxu0 0.0
  %733 = vmatmul.mubr.f32.gmra.mrb[0].mxu0 %v666
  %v734 = vpop.f32.mrb[0].mxu0
  %v735 = vadd.f32 %v664, %v734
  %v736 = vpop.f32.mrb[0].mxu0
  %737 = vdwg.mxu0
  %vm738 = vcmp.eq.s32.totalorder %v242, 3
  %v739 = vsel %vm738, 1, 0
  %vm740 = vcmp.eq.s32.totalorder %v739, 1
  %v741 = vlaneseq
  %v742 = vshrl.u32 %v741, 7
  %v743 = vsub.s32 0, %v742
  %v744 = vrot.slane %v735, %v743
  %v745 = vsel %vm740, %v744, %v576
  %v746 = vld [vmem:[%s9] sm:$0xff]
  %v747 = vld [vmem:[%s9 + $0x8] sm:$0xff]
  %v748 = vld [vmem:[%s10] sm:$0x1]
  %v750 = vlaneseq
  %v751 = vshrl.u32 %v750, 7
  %v752 = vsub.s32 0, %v751
  %v753 = vrot.slane %v748, %v752
  %vm755 = vcmask 130048
  %v757 = vsel %vm755, %v745, 0
  %759 = vmatprep.subr.mxu0 0.0
  %760 = vmatpush1.msra.mxu0 %v746
  %761 = vmatprep.subr.mxu0 0.0
  %762 = vmatpush1.msra.mxu0 %v747
  %763 = vmatprep.subr.mxu0 0.0
  %764 = vmatpush1.msra.mxu0 0.0
  %765 = vmatprep.subr.mxu0 0.0
  %766 = vmatpush1.msra.mxu0 0.0
  %767 = vmatprep.subr.mxu0 0.0
  %768 = vmatpush1.msra.mxu0 0.0
  %769 = vmatprep.subr.mxu0 0.0
  %770 = vmatpush1.msra.mxu0 0.0
  %771 = vmatprep.subr.mxu0 0.0
  %772 = vmatpush1.msra.mxu0 0.0
  %773 = vmatprep.subr.mxu0 0.0
  %774 = vmatpush1.msra.mxu0 0.0
  %775 = vmatprep.subr.mxu0 0.0
  %776 = vmatpush1.msra.mxu0 0.0
  %777 = vmatprep.subr.mxu0 0.0
  %778 = vmatpush1.msra.mxu0 0.0
  %779 = vmatprep.subr.mxu0 0.0
  %780 = vmatpush1.msra.mxu0 0.0
  %781 = vmatprep.subr.mxu0 0.0
  %782 = vmatpush1.msra.mxu0 0.0
  %783 = vmatprep.subr.mxu0 0.0
  %784 = vmatpush1.msra.mxu0 0.0
  %785 = vmatprep.subr.mxu0 0.0
  %786 = vmatpush1.msra.mxu0 0.0
  %787 = vmatprep.subr.mxu0 0.0
  %788 = vmatpush1.msra.mxu0 0.0
  %789 = vmatprep.subr.mxu0 0.0
  %790 = vmatpush1.msra.mxu0 0.0
  %791 = vmatprep.subr.mxu0 0.0
  %792 = vmatpush1.msra.mxu0 0.0
  %793 = vmatprep.subr.mxu0 0.0
  %794 = vmatpush1.msra.mxu0 0.0
  %795 = vmatprep.subr.mxu0 0.0
  %796 = vmatpush1.msra.mxu0 0.0
  %797 = vmatprep.subr.mxu0 0.0
  %798 = vmatpush1.msra.mxu0 0.0
  %799 = vmatprep.subr.mxu0 0.0
  %800 = vmatpush1.msra.mxu0 0.0
  %801 = vmatprep.subr.mxu0 0.0
  %802 = vmatpush1.msra.mxu0 0.0
  %803 = vmatprep.subr.mxu0 0.0
  %804 = vmatpush1.msra.mxu0 0.0
  %805 = vmatprep.subr.mxu0 0.0
  %806 = vmatpush1.msra.mxu0 0.0
  %807 = vmatprep.subr.mxu0 0.0
  %808 = vmatpush1.msra.mxu0 0.0
  %809 = vmatprep.subr.mxu0 0.0
  %810 = vmatpush1.msra.mxu0 0.0
  %811 = vmatprep.subr.mxu0 0.0
  %812 = vmatpush1.msra.mxu0 0.0
  %813 = vmatprep.subr.mxu0 0.0
  %814 = vmatpush1.msra.mxu0 0.0
  %815 = vmatprep.subr.mxu0 0.0
  %816 = vmatpush1.msra.mxu0 0.0
  %817 = vmatprep.subr.mxu0 0.0
  %818 = vmatpush1.msra.mxu0 0.0
  %819 = vmatprep.subr.mxu0 0.0
  %820 = vmatpush1.msra.mxu0 0.0
  %821 = vmatprep.subr.mxu0 0.0
  %822 = vmatpush1.msra.mxu0 0.0
  %823 = vmatprep.mubr.f32.mxu0 0.0
  %824 = vmatmul.mubr.f32.gmra.mrb[0].mxu0 %v757
  %v825 = vpop.f32.mrb[0].mxu0
  %v826 = vadd.f32 %v753, %v825
  %v827 = vpop.f32.mrb[0].mxu0
  %828 = vdwg.mxu0
  %v829 = vmax.f32 %v826, 0.0
  %v830 = vld [vmem:[%s11] sm:$0xff]
  %v831 = vld [vmem:[%s11 + $0x8] sm:$0xff]
  %v832 = vld [vmem:[%s11 + $0x10] sm:$0xff]
  %v833 = vld [vmem:[%s11 + $0x18] sm:$0xff]
  %v834 = vld [vmem:[%s12] sm:$0x1]
  %v836 = vlaneseq
  %v837 = vshrl.u32 %v836, 7
  %v838 = vsub.s32 0, %v837
  %v839 = vrot.slane %v834, %v838
  %v842 = vsel %vm166, %v829, 0
  %844 = vmatprep.subr.mxu0 0.0
  %845 = vmatpush1.msra.mxu0 %v830
  %846 = vmatprep.subr.mxu0 0.0
  %847 = vmatpush1.msra.mxu0 %v831
  %848 = vmatprep.subr.mxu0 0.0
  %849 = vmatpush1.msra.mxu0 %v832
  %850 = vmatprep.subr.mxu0 0.0
  %851 = vmatpush1.msra.mxu0 %v833
  %852 = vmatprep.subr.mxu0 0.0
  %853 = vmatpush1.msra.mxu0 0.0
  %854 = vmatprep.subr.mxu0 0.0
  %855 = vmatpush1.msra.mxu0 0.0
  %856 = vmatprep.subr.mxu0 0.0
  %857 = vmatpush1.msra.mxu0 0.0
  %858 = vmatprep.subr.mxu0 0.0
  %859 = vmatpush1.msra.mxu0 0.0
  %860 = vmatprep.subr.mxu0 0.0
  %861 = vmatpush1.msra.mxu0 0.0
  %862 = vmatprep.subr.mxu0 0.0
  %863 = vmatpush1.msra.mxu0 0.0
  %864 = vmatprep.subr.mxu0 0.0
  %865 = vmatpush1.msra.mxu0 0.0
  %866 = vmatprep.subr.mxu0 0.0
  %867 = vmatpush1.msra.mxu0 0.0
  %868 = vmatprep.subr.mxu0 0.0
  %869 = vmatpush1.msra.mxu0 0.0
  %870 = vmatprep.subr.mxu0 0.0
  %871 = vmatpush1.msra.mxu0 0.0
  %872 = vmatprep.subr.mxu0 0.0
  %873 = vmatpush1.msra.mxu0 0.0
  %874 = vmatprep.subr.mxu0 0.0
  %875 = vmatpush1.msra.mxu0 0.0
  %876 = vmatprep.subr.mxu0 0.0
  %877 = vmatpush1.msra.mxu0 0.0
  %878 = vmatprep.subr.mxu0 0.0
  %879 = vmatpush1.msra.mxu0 0.0
  %880 = vmatprep.subr.mxu0 0.0
  %881 = vmatpush1.msra.mxu0 0.0
  %882 = vmatprep.subr.mxu0 0.0
  %883 = vmatpush1.msra.mxu0 0.0
  %884 = vmatprep.subr.mxu0 0.0
  %885 = vmatpush1.msra.mxu0 0.0
  %886 = vmatprep.subr.mxu0 0.0
  %887 = vmatpush1.msra.mxu0 0.0
  %888 = vmatprep.subr.mxu0 0.0
  %889 = vmatpush1.msra.mxu0 0.0
  %890 = vmatprep.subr.mxu0 0.0
  %891 = vmatpush1.msra.mxu0 0.0
  %892 = vmatprep.subr.mxu0 0.0
  %893 = vmatpush1.msra.mxu0 0.0
  %894 = vmatprep.subr.mxu0 0.0
  %895 = vmatpush1.msra.mxu0 0.0
  %896 = vmatprep.subr.mxu0 0.0
  %897 = vmatpush1.msra.mxu0 0.0
  %898 = vmatprep.subr.mxu0 0.0
  %899 = vmatpush1.msra.mxu0 0.0
  %900 = vmatprep.subr.mxu0 0.0
  %901 = vmatpush1.msra.mxu0 0.0
  %902 = vmatprep.subr.mxu0 0.0
  %903 = vmatpush1.msra.mxu0 0.0
  %904 = vmatprep.subr.mxu0 0.0
  %905 = vmatpush1.msra.mxu0 0.0
  %906 = vmatprep.subr.mxu0 0.0
  %907 = vmatpush1.msra.mxu0 0.0
  %908 = vmatprep.mubr.f32.mxu0 0.0
  %909 = vmatmul.mubr.f32.gmra.mrb[0].mxu0 %v842
  %v910 = vpop.f32.mrb[0].mxu0
  %v911 = vadd.f32 %v839, %v910
  %v912 = vpop.f32.mrb[0].mxu0
  %913 = vdwg.mxu0
  %v914 = vmax.f32 %v911, 0.0
  %v915 = vld [vmem:[%s13] sm:$0xff]
  %v916 = vld [vmem:[%s13 + $0x8] sm:$0xff]
  %v917 = vld [vmem:[#allocation2] sm:$0x1]
  %v919 = vlaneseq
  %v920 = vshrl.u32 %v919, 7
  %v921 = vsub.s32 0, %v920
  %v922 = vrot.slane %v917, %v921
  %v925 = vsel %vm755, %v914, 0
  %927 = vmatprep.subr.mxu0 0.0
  %928 = vmatpush1.msra.mxu0 %v915
  %929 = vmatprep.subr.mxu0 0.0
  %930 = vmatpush1.msra.mxu0 %v916
  %931 = vmatprep.subr.mxu0 0.0
  %932 = vmatpush1.msra.mxu0 0.0
  %933 = vmatprep.subr.mxu0 0.0
  %934 = vmatpush1.msra.mxu0 0.0
  %935 = vmatprep.subr.mxu0 0.0
  %936 = vmatpush1.msra.mxu0 0.0
  %937 = vmatprep.subr.mxu0 0.0
  %938 = vmatpush1.msra.mxu0 0.0
  %939 = vmatprep.subr.mxu0 0.0
  %940 = vmatpush1.msra.mxu0 0.0
  %941 = vmatprep.subr.mxu0 0.0
  %942 = vmatpush1.msra.mxu0 0.0
  %943 = vmatprep.subr.mxu0 0.0
  %944 = vmatpush1.msra.mxu0 0.0
  %945 = vmatprep.subr.mxu0 0.0
  %946 = vmatpush1.msra.mxu0 0.0
  %947 = vmatprep.subr.mxu0 0.0
  %948 = vmatpush1.msra.mxu0 0.0
  %949 = vmatprep.subr.mxu0 0.0
  %950 = vmatpush1.msra.mxu0 0.0
  %951 = vmatprep.subr.mxu0 0.0
  %952 = vmatpush1.msra.mxu0 0.0
  %953 = vmatprep.subr.mxu0 0.0
  %954 = vmatpush1.msra.mxu0 0.0
  %955 = vmatprep.subr.mxu0 0.0
  %956 = vmatpush1.msra.mxu0 0.0
  %957 = vmatprep.subr.mxu0 0.0
  %958 = vmatpush1.msra.mxu0 0.0
  %959 = vmatprep.subr.mxu0 0.0
  %960 = vmatpush1.msra.mxu0 0.0
  %961 = vmatprep.subr.mxu0 0.0
  %962 = vmatpush1.msra.mxu0 0.0
  %963 = vmatprep.subr.mxu0 0.0
  %964 = vmatpush1.msra.mxu0 0.0
  %965 = vmatprep.subr.mxu0 0.0
  %966 = vmatpush1.msra.mxu0 0.0
  %967 = vmatprep.subr.mxu0 0.0
  %968 = vmatpush1.msra.mxu0 0.0
  %969 = vmatprep.subr.mxu0 0.0
  %970 = vmatpush1.msra.mxu0 0.0
  %971 = vmatprep.subr.mxu0 0.0
  %972 = vmatpush1.msra.mxu0 0.0
  %973 = vmatprep.subr.mxu0 0.0
  %974 = vmatpush1.msra.mxu0 0.0
  %975 = vmatprep.subr.mxu0 0.0
  %976 = vmatpush1.msra.mxu0 0.0
  %977 = vmatprep.subr.mxu0 0.0
  %978 = vmatpush1.msra.mxu0 0.0
  %979 = vmatprep.subr.mxu0 0.0
  %980 = vmatpush1.msra.mxu0 0.0
  %981 = vmatprep.subr.mxu0 0.0
  %982 = vmatpush1.msra.mxu0 0.0
  %983 = vmatprep.subr.mxu0 0.0
  %984 = vmatpush1.msra.mxu0 0.0
  %985 = vmatprep.subr.mxu0 0.0
  %986 = vmatpush1.msra.mxu0 0.0
  %987 = vmatprep.subr.mxu0 0.0
  %988 = vmatpush1.msra.mxu0 0.0
  %989 = vmatprep.subr.mxu0 0.0
  %990 = vmatpush1.msra.mxu0 0.0
  %991 = vmatprep.mubr.f32.mxu0 0.0
  %992 = vmatmul.mubr.f32.gmra.mrb[0].mxu0 %v925
  %v993 = vpop.f32.mrb[0].mxu0
  %v994 = vadd.f32 %v922, %v993
  %v995 = vpop.f32.mrb[0].mxu0
  %996 = vdwg.mxu0
  %v997 = vmul.f32 %v994, 0.5
  %v998 = vtanh.pop %v997
  %v999 = vadd.f32 %v998, 1.0
  %v1000 = vmul.f32 %v999, 0.5
  %vm1001 = vcmask 3072
  %1002 = vst.msk [vmem:[%s15] sm:$0xf] %vm1001, %v1000
  // Predicated region
  $region62: #{tpu_custom_call.1} parent=0 // pred_check
    _
  $region63: #{tpu_custom_call.1} parent=0 // pred_check_branch
    %1004 = sbr.rel (0) target = $region65
  $region64: #{tpu_custom_call.1} parent=0 // pred_region
    _
  $region65: #{tpu_custom_call.1} parent=0 // pred_fallthru
    _
  // Predicated region
  $region66: #{tpu_custom_call.1} parent=0 // pred_check
    _
  $region67: #{tpu_custom_call.1} parent=0 // pred_check_branch
    %1006 = sbr.rel (0) target = $region69
  $region68: #{tpu_custom_call.1} parent=0 // pred_region
    _
  $region69: #{tpu_custom_call.1} parent=0 // pred_fallthru
    _

</llo_original>
